<compile_context>
chip_gen: v6e
topology: v6e:2x2x1
jax: 0.10.0
libtpu: 0.0.40
codegen_flags: <defaults>
</compile_context>

<pallas_src>
import functools

import jax
import jax.numpy as jnp
from jax.experimental import pallas as pl
from jax.experimental.pallas import tpu as pltpu


def _round_up(x, m):
    return (x + m - 1) // m * m


def _conv_block_kernel(x_ref, w_ref, b_ref, o_ref, rhs_ref, *, B_tile, L, K, pad):
    """One batch tile per grid step.

    x_ref:   (B_tile, C_in, L)       unpadded input tile, NCL (L on lanes)
    w_ref:   (C_out_p, K*C_in)       im2col-flattened weights (bf16 or f32)
    b_ref:   (C_out_p, 1)            bias, f32
    o_ref:   (1, C_out_p, B_tile*L)  lane-dense output slab
    rhs_ref: (K*C_in, B_tile*L)      VMEM scratch: im2col operand
    """
    C_in = x_ref.shape[1]
    mm_dtype = rhs_ref.dtype

    # Build the im2col operand ONCE per grid step.  The 'same'-conv halo is
    # handled here: scratch is zero-filled, then each tap's valid columns are
    # written, so edge columns of the +-shift taps stay zero (no wrapper pad).
    # NOTE: zero-fill every step (not only step 0) so megacore grid sharding
    # stays correct -- scratch is per-core.
    rhs_ref[...] = jnp.zeros(rhs_ref.shape, mm_dtype)
    x = x_ref[...].astype(mm_dtype)                       # (B_tile, C_in, L)
    for b in range(B_tile):                               # static -> unrolled
        for k in range(K):
            s = k - pad                                   # tap shift along L
            lo, hi = max(0, -s), L - max(0, s)            # valid output columns
            rhs_ref[k * C_in:(k + 1) * C_in,
                    b * L + lo: b * L + hi] = x[b, :, lo + s: hi + s]

    # Single MXU matmul per grid step; f32 accumulate, f32 epilogue.
    acc = jnp.dot(w_ref[...], rhs_ref[...], preferred_element_type=jnp.float32)
    acc = acc + b_ref[...]                                # bias
    acc = jnp.maximum(acc, 0.0)                           # ReLU
    # Dropout: identity (inference / eval mode).
    o_ref[0] = acc.astype(o_ref.dtype)


def _tpu_vmem_and_cores():
    """(VMEM capacity bytes, multi_tensorcore?) -- generation-aware, safe fallback."""
    vmem = 64 << 20                      # conservative default: fits every generation
    cores = None
    try:
        info = pltpu.get_tpu_info()
        vmem = int(getattr(info, "vmem_capacity_bytes", vmem))
        for name in ("num_cores", "core_count", "num_tensorcores",
                     "tensorcore_count", "tensorcores_per_chip"):
            v = getattr(info, name, None)
            if v:
                cores = int(v)
                break
    except Exception:
        pass
    if cores is None:
        # Heuristic: v7x exposes 64 MiB VMEM per TensorCore and has 2 TCs/chip;
        # v5e / v6e expose 128 MiB and have a single TensorCore.
        cores = 2 if vmem <= (64 << 20) else 1
    return vmem, cores > 1


def _pick_batch_tile(N, C_in, C_out_p, L, K, *, x_bytes, mm_bytes,
                     vmem_budget_bytes, multi_core, max_unroll=64):
    """Largest batch tile whose per-step VMEM footprint fits the budget.

    Accounts for double-buffered x/out blocks, the (double-buffered) weight and
    bias blocks, the im2col scratch and the f32 accumulator -- not just x/out.
    """
    def per_step_bytes(bt):
        nl = bt * L
        x_blk = 2 * bt * C_in * L * x_bytes           # input tile (2 buffers)
        o_blk = 2 * C_out_p * nl * x_bytes            # output slab (2 buffers)
        w_blk = 2 * C_out_p * K * C_in * mm_bytes     # constant index, still 2 bufs
        b_blk = 2 * C_out_p * 4
        rhs = K * C_in * nl * mm_bytes                # im2col VMEM scratch
        acc = C_out_p * nl * 4                        # f32 matmul result
        return x_blk + o_blk + w_blk + b_blk + rhs + acc

    bt = max(1, min(N, max_unroll))
    while bt > 1 and per_step_bytes(bt) > vmem_budget_bytes:
        bt -= 1
    if multi_core and N > 1:
        # Keep an even number of grid steps so both TensorCores get equal work
        # under dimension_semantics=("parallel",).  Skipped on single-TC chips
        # (v5e / v6e) where splitting is just serial per-step overhead.
        g = pl.cdiv(N, bt)
        if g % 2 != 0:
            bt = pl.cdiv(N, g + 1)
    return bt


def conv_block(x_ncl, weight, bias, *, padding=1, matmul_dtype=jnp.bfloat16):
    """Conv1d(kernel_size=K, padding, stride=1) + ReLU (+ identity Dropout).

    x_ncl: (N, C_in, L) ; weight: (C_out, C_in, K) ; bias: (C_out,).
    """
    N, C_in, L = x_ncl.shape
    C_out, C_in_w, K = weight.shape
    assert C_in_w == C_in, (C_in_w, C_in)
    assert K == 2 * padding + 1, "assumes stride=1 'same' conv (K == 2*pad+1)"
    assert L > padding, "sequence must be longer than the conv halo"

    # im2col weight layout: flat row f = k*C_in + ci  <->  weight[co, ci, k].
    w_flat = jnp.transpose(weight, (0, 2, 1)).reshape(C_out, K * C_in)

    # Pad C_out to a sublane multiple (weights/bias only -> no extra x traffic).
    # TODO(synk): for large channel counts also pad C_in / K*C_in to 8 (f32) /
    #             16 (bf16) sublanes and fold the bias into the matmul.
    C_out_p = _round_up(C_out, 8)
    if C_out_p != C_out:
        w_flat = jnp.pad(w_flat, ((0, C_out_p - C_out), (0, 0)))
        bias = jnp.pad(bias, (0, C_out_p - C_out))
    # bf16 operands hit the MXU's native rate; accumulation stays f32.
    w_flat = w_flat.astype(matmul_dtype)
    b_col = bias.reshape(C_out_p, 1).astype(jnp.float32)

    vmem_cap, multi_core = _tpu_vmem_and_cores()
    budget = min(vmem_cap * 3 // 8, 48 << 20)
    B_tile = _pick_batch_tile(
        N, C_in, C_out_p, L, K,
        x_bytes=x_ncl.dtype.itemsize,
        mm_bytes=jnp.dtype(matmul_dtype).itemsize,
        vmem_budget_bytes=budget,
        multi_core=multi_core)
    G = pl.cdiv(N, B_tile)          # cdiv grid: no "divisor of N" requirement
    NL = B_tile * L

    kernel = functools.partial(_conv_block_kernel,
                               B_tile=B_tile, L=L, K=K, pad=padding)

    out_slab = pl.pallas_call(
        kernel,
        out_shape=jax.ShapeDtypeStruct((G, C_out_p, NL), x_ncl.dtype),
        grid_spec=pltpu.PrefetchScalarGridSpec(
            num_scalar_prefetch=0,
            grid=(G,),
            in_specs=[
                # unpadded batch tile of the input (no wrapper jnp.pad pass)
                pl.BlockSpec((B_tile, C_in, L), lambda n: (n, 0, 0)),
                # full weight / bias: identical block every step (not re-DMA'd).
                # NOTE: for large weights, single-buffer these (Buffered(1) /
                # one-shot DMA to scratch); the budget above counts both buffers.
                pl.BlockSpec((C_out_p, K * C_in), lambda n: (0, 0)),
                pl.BlockSpec((C_out_p, 1), lambda n: (0, 0)),
            ],
            out_specs=pl.BlockSpec((1, C_out_p, NL), lambda n: (n, 0, 0)),
            scratch_shapes=[pltpu.VMEM((K * C_in, NL), matmul_dtype)],
        ),
        compiler_params=pltpu.CompilerParams(
            dimension_semantics=("parallel",),
            vmem_limit_bytes=int(min(vmem_cap * 5 // 8, 96 << 20)),
        ),
    )(x_ncl, w_flat, b_col)

    # Un-slab (layout plumbing only): (G, C_out_p, B_tile*L) -> (N, C_out, L),
    # dropping the C_out padding rows and the partial tail tile's extra rows.
    out = out_slab.reshape(G, C_out_p, B_tile, L)
    out = jnp.transpose(out, (0, 2, 1, 3)).reshape(G * B_tile, C_out_p, L)
    return out[:N, :C_out, :]


def _reference(x_ncl, weight, bias, padding=1):
    """Pure-JAX reference of Conv1d + ReLU (+ identity dropout)."""
    out = jax.lax.conv_general_dilated(
        x_ncl, weight,
        window_strides=(1,),
        padding=[(padding, padding)],
        dimension_numbers=("NCH", "OIH", "NCH"),
    )
    out = out + bias[None, :, None]
    return jnp.maximum(out, 0.0)


if __name__ == "__main__":
    key = jax.random.PRNGKey(0)
    k_x, k_w, k_b = jax.random.split(key, 3)

    N, C_in, C_out, L, K = 2, 4, 8, 16, 3

    x = jax.random.normal(k_x, (N, C_in, L), dtype=jnp.float32)
    # Deterministic synthetic params (PyTorch shapes: (C_out, C_in, K), (C_out,))
    weight = jax.random.normal(k_w, (C_out, C_in, K), dtype=jnp.float32) * 0.1
    bias = jax.random.normal(k_b, (C_out,), dtype=jnp.float32) * 0.1

    ref = _reference(x, weight, bias, padding=1)

    # f32-operand path: tight check against the XLA conv reference.
    out_f32 = jax.block_until_ready(
        conv_block(x, weight, bias, padding=1, matmul_dtype=jnp.float32))
    assert out_f32.shape == (N, C_out, L), out_f32.shape
    assert jnp.allclose(out_f32, ref, atol=1e-4, rtol=1e-4), (
        float(jnp.max(jnp.abs(out_f32 - ref))))

    # Default bf16-operand path (MXU-native rate), f32 accumulate/epilogue.
    out_bf16 = jax.block_until_ready(conv_block(x, weight, bias, padding=1))
    assert out_bf16.shape == (N, C_out, L), out_bf16.shape
    assert jnp.allclose(out_bf16, ref, atol=2e-2, rtol=2e-2), (
        float(jnp.max(jnp.abs(out_bf16 - ref))))

    print("KERNEL_OK")
</pallas_src>

<mosaic_0001>
module attributes {stable_mosaic.version = 11 : i64} {
  func.func @_conv_block_kernel(%arg0: i32, %arg1: memref<1x4x16xf32, #tpu.memory_space<vmem>>, %arg2: memref<8x12xf32, #tpu.memory_space<vmem>>, %arg3: memref<8x1xf32, #tpu.memory_space<vmem>>, %arg4: memref<1x8x16xf32, #tpu.memory_space<vmem>>, %arg5: memref<12x16xf32, #tpu.memory_space<vmem>>) attributes {dimension_semantics = [#tpu.dimension_semantics<parallel>], iteration_bounds = array<i64: 2>, scalar_prefetch = 0 : i64, scratch_operands = 1 : i64, tpu.core_type = #tpu.core_type<tc>, window_params = [{transform_indices = @transform_0, window_bounds = array<i64: 1, 4, 16>}, {pipeline_mode = #tpu.pipeline_mode<synchronous>, transform_indices = @transform_1, window_bounds = array<i64: 8, 12>}, {pipeline_mode = #tpu.pipeline_mode<synchronous>, transform_indices = @transform_2, window_bounds = array<i64: 8, 1>}, {transform_indices = @transform_3, window_bounds = array<i64: 1, 8, 16>}]} {
    %cst = arith.constant 0.000000e+00 : f32
    %0 = vector.broadcast %cst : f32 to vector<12x16xf32>
    %c0 = arith.constant 0 : index
    %c0_0 = arith.constant 0 : index
    %1 = vector.load %arg5[%c0, %c0_0] : memref<12x16xf32, #tpu.memory_space<vmem>>, vector<12x16xf32>
    tpu.vector_store %arg5[%c0, %c0_0], %0 {strides = array<i32>} : memref<12x16xf32, #tpu.memory_space<vmem>>, vector<12x16xf32>,
    %c0_1 = arith.constant 0 : index
    %c0_2 = arith.constant 0 : index
    %c0_3 = arith.constant 0 : index
    %2 = vector.load %arg1[%c0_1, %c0_2, %c0_3] : memref<1x4x16xf32, #tpu.memory_space<vmem>>, vector<1x4x16xf32>
    %3 = vector.extract_strided_slice %2 {offsets = [0, 0, 0], sizes = [1, 4, 15], strides = [1, 1, 1]} : vector<1x4x16xf32> to vector<1x4x15xf32>
    %4 = vector.shape_cast %3 : vector<1x4x15xf32> to vector<4x15xf32>
    %c0_4 = arith.constant 0 : index
    %c1 = arith.constant 1 : index
    %5 = vector.load %arg5[%c0_4, %c1] : memref<12x16xf32, #tpu.memory_space<vmem>>, vector<4x15xf32>
    tpu.vector_store %arg5[%c0_4, %c1], %4 {strides = array<i32>} : memref<12x16xf32, #tpu.memory_space<vmem>>, vector<4x15xf32>,
    %6 = vector.shape_cast %2 : vector<1x4x16xf32> to vector<4x16xf32>
    %c4 = arith.constant 4 : index
    %c0_5 = arith.constant 0 : index
    %7 = vector.load %arg5[%c4, %c0_5] : memref<12x16xf32, #tpu.memory_space<vmem>>, vector<4x16xf32>
    tpu.vector_store %arg5[%c4, %c0_5], %6 {strides = array<i32>} : memref<12x16xf32, #tpu.memory_space<vmem>>, vector<4x16xf32>,
    %8 = vector.extract_strided_slice %2 {offsets = [0, 0, 1], sizes = [1, 4, 15], strides = [1, 1, 1]} : vector<1x4x16xf32> to vector<1x4x15xf32>
    %9 = vector.shape_cast %8 : vector<1x4x15xf32> to vector<4x15xf32>
    %c8 = arith.constant 8 : index
    %c0_6 = arith.constant 0 : index
    %10 = vector.load %arg5[%c8, %c0_6] : memref<12x16xf32, #tpu.memory_space<vmem>>, vector<4x15xf32>
    tpu.vector_store %arg5[%c8, %c0_6], %9 {strides = array<i32>} : memref<12x16xf32, #tpu.memory_space<vmem>>, vector<4x15xf32>,
    %c0_7 = arith.constant 0 : index
    %c0_8 = arith.constant 0 : index
    %11 = vector.load %arg2[%c0_7, %c0_8] : memref<8x12xf32, #tpu.memory_space<vmem>>, vector<8x12xf32>
    %c0_9 = arith.constant 0 : index
    %c0_10 = arith.constant 0 : index
    %12 = vector.load %arg5[%c0_9, %c0_10] : memref<12x16xf32, #tpu.memory_space<vmem>>, vector<12x16xf32>
    %cst_11 = arith.constant dense<0.000000e+00> : vector<8x16xf32>
    %13 = tpu.matmul %11, %12, %cst_11 {dimension_numbers = #tpu.dot_dimension_numbers<[1], [0], [0], [1], [0, 0, 1, 1], [], []>} : vector<8x12xf32>, vector<12x16xf32>, vector<8x16xf32> -> vector<8x16xf32>
    %c0_12 = arith.constant 0 : index
    %c0_13 = arith.constant 0 : index
    %14 = vector.load %arg3[%c0_12, %c0_13] : memref<8x1xf32, #tpu.memory_space<vmem>>, vector<8x1xf32>
    %15 = vector.broadcast %14 : vector<8x1xf32> to vector<8x16xf32>
    %16 = arith.addf %13, %15 : vector<8x16xf32>
    %cst_14 = arith.constant 0.000000e+00 : f32
    %17 = vector.broadcast %cst_14 : f32 to vector<8x16xf32>
    %18 = arith.maximumf %16, %17 : vector<8x16xf32>
    %c0_15 = arith.constant 0 : index
    %c0_16 = arith.constant 0 : index
    %c0_17 = arith.constant 0 : index
    %19 = vector.load %arg4[%c0_15, %c0_16, %c0_17] : memref<1x8x16xf32, #tpu.memory_space<vmem>>, vector<1x8x16xf32>
    %20 = vector.shape_cast %19 : vector<1x8x16xf32> to vector<8x16xf32>
    %21 = vector.shape_cast %18 : vector<8x16xf32> to vector<1x8x16xf32>
    tpu.vector_store %arg4[%c0_15, %c0_16, %c0_17], %21 {strides = array<i32>} : memref<1x8x16xf32, #tpu.memory_space<vmem>>, vector<1x8x16xf32>,
    return
  }
  func.func @transform_0(%arg0: i32) -> (i32, i32, i32) {
    %c0_i32 = arith.constant 0 : i32
    %c0_i32_0 = arith.constant 0 : i32
    %c0_i32_1 = arith.constant 0 : i32
    return %arg0, %c0_i32, %c0_i32_0 : i32, i32, i32
  }
  func.func @transform_1(%arg0: i32) -> (i32, i32) {
    %c0_i32 = arith.constant 0 : i32
    %c0_i32_0 = arith.constant 0 : i32
    %c0_i32_1 = arith.constant 0 : i32
    return %c0_i32, %c0_i32_0 : i32, i32
  }
  func.func @transform_2(%arg0: i32) -> (i32, i32) {
    %c0_i32 = arith.constant 0 : i32
    %c0_i32_0 = arith.constant 0 : i32
    %c0_i32_1 = arith.constant 0 : i32
    return %c0_i32, %c0_i32_0 : i32, i32
  }
  func.func @transform_3(%arg0: i32) -> (i32, i32, i32) {
    %c0_i32 = arith.constant 0 : i32
    %c0_i32_0 = arith.constant 0 : i32
    %c0_i32_1 = arith.constant 0 : i32
    return %arg0, %c0_i32, %c0_i32_0 : i32, i32, i32
  }
}

</mosaic_0001>

<llo_original>
// kernel: tpu_custom_call.1
$region0: #{tpu_custom_call.1}
  #allocation0 [shape = 'u32[]', space=smem, size = 0x4, offset = 0x4, fixed_abs, tag = 'smem constant byte address 0x4 - core index']
  #allocation1 [shape = 'u32[144,128]{1,0:T(1,128)}', space=vmem, size = 0x12000, scoped, tag = 'internal scratch']
  #allocation2 [shape = 'f32[12,16]{1,0:T(8,128)}', space=vmem, size = 0x2000, scoped, tag = 'scratch operand']
  %s0 = inlined_call_operand.vmem [shape: f32[2,4,16], index: 0, kind: input, shape index: {}]
  %s1 = inlined_call_operand.hbm [shape: f32[8,12], index: 1, kind: input, shape index: {}]
  %s2 = inlined_call_operand.vmem [shape: f32[8,1], index: 2, kind: input, shape index: {}]
  %s3 = inlined_call_operand.hbm [shape: f32[2,8,16], index: 3, kind: output, shape index: {}]
  %s4 = sld [smem:[#allocation0]]
  $region49: #{tpu_custom_call.1} parent=0
    _
  %s6 = ssub.s32 1, %s4
  %s7 = scalar_select 0, %s6, %s4
  $region1: #{tpu_custom_call.1} parent=0
    #allocation3 [shape = 'u8[4096]{0}', space=vmem, size = 0x1000, scoped, tag = 'input window, operand 1, single buffered']
    #allocation4 [shape = 's32[2]{0}', space=sflag, size = 0x8, scoped, tag = 'scoped memory for tpu_custom_call.1']
    #allocation5 [shape = 's32[2]{0}', space=sflag, size = 0x8, scoped, tag = 'scoped memory for tpu_custom_call.1']
    #allocation6 [shape = 'u8[8192]{0}', space=vmem, size = 0x2000, scoped, tag = 'output window, operand 0']
    %8 = vsyncpa [#allocation4], 0
    %9 = vsyncpa [#allocation5], 0
    %s10 = scalar_lea.sflag [#allocation5], 1
    %11 = vsyncpa %s10, 0
    loop: start=0, step=1, limit=4
    $region2: #{tpu_custom_call.1} parent=1 // loop_pre_header
      _
    $region3: #{tpu_custom_call.1} parent=1 // loop_header
      %s13 = sphi 0, %s17
      %p14 = scmp.ge.s32.totalorder %s13, 4
      %s23 = sphi 0, %s25
      %s26 = sphi 0, %s23
      %s27 = sphi 0, %s26
      %s43 = sphi 0, %s27
      %s47 = sphi 0, %s47
      %s49 = sphi 0, %s47
      %s50 = sphi 0, %s49
      %s64 = sphi 0, %s50
      %s68 = sphi 0, %s68
      %s70 = sphi 0, %s68
      %s71 = sphi 0, %s70
      %s85 = sphi 0, %s71
      %s91 = sphi 0, %s93
      %s94 = sphi 0, %s91
      %s95 = sphi 0, %s94
      %s111 = sphi 0, %s95
    $region4: #{tpu_custom_call.1} parent=1 // loop_header_branch
      %16 = sbr.rel (%p14) target = $region8
    $region5: #{tpu_custom_call.1} parent=1 // loop_body
      %s18 = ssub.s32 %s13, 1
      %s19 = ssub.s32 %s13, 2
      %s20 = sadd.s32 %s13, 1
      %s21 = ssub.s32 %s13, %s20
      %p22 = scmp.eq.s32.totalorder %s21, 0
      %s24 = sadd.s32 %s23, 1
      %s25 = scalar_select %p22, %s23, %s24
      %p28 = pneg %p22
      %p29 = scmp.eq.s32.totalorder %s13, 1
      %p30 = por %p28, %p29
      %p31 = scmp.ne.s32.totalorder %s23, %s26
      %p32 = scmp.eq.s32.totalorder %s13, 0
      %p33 = por %p31, %p32
      %p34 = scmp.ne.s32.totalorder %s23, %s26
      %p35 = scmp.eq.s32.totalorder %s18, 1
      %p36 = por %p34, %p35
      %p37 = scmp.ne.s32.totalorder %s26, %s27
      %p38 = scmp.eq.s32.totalorder %s18, 0
      %p39 = por %p37, %p38
      %p40 = scmp.ne.s32.totalorder %s26, %s27
      %p41 = scmp.eq.s32.totalorder %s19, 1
      %p42 = por %p40, %p41
      %p44 = scmp.ne.s32.totalorder %s27, %s43
      %p45 = scmp.eq.s32.totalorder %s19, 0
      %p46 = por %p44, %p45
      %s48 = sadd.s32 %s47, 1
      %p51 = scmp.eq.s32.totalorder %s13, 1
      %p52 = scmp.ne.s32.totalorder %s47, %s49
      %p53 = scmp.eq.s32.totalorder %s13, 0
      %p54 = por %p52, %p53
      %p55 = scmp.ne.s32.totalorder %s47, %s49
      %p56 = scmp.eq.s32.totalorder %s18, 1
      %p57 = por %p55, %p56
      %p58 = scmp.ne.s32.totalorder %s49, %s50
      %p59 = scmp.eq.s32.totalorder %s18, 0
      %p60 = por %p58, %p59
      %p61 = scmp.ne.s32.totalorder %s49, %s50
      %p62 = scmp.eq.s32.totalorder %s19, 1
      %p63 = por %p61, %p62
      %p65 = scmp.ne.s32.totalorder %s50, %s64
      %p66 = scmp.eq.s32.totalorder %s19, 0
      %p67 = por %p65, %p66
      %s69 = sadd.s32 %s68, 1
      %p72 = scmp.eq.s32.totalorder %s13, 1
      %p73 = scmp.ne.s32.totalorder %s68, %s70
      %p74 = scmp.eq.s32.totalorder %s13, 0
      %p75 = por %p73, %p74
      %p76 = scmp.ne.s32.totalorder %s68, %s70
      %p77 = scmp.eq.s32.totalorder %s18, 1
      %p78 = por %p76, %p77
      %p79 = scmp.ne.s32.totalorder %s70, %s71
      %p80 = scmp.eq.s32.totalorder %s18, 0
      %p81 = por %p79, %p80
      %p82 = scmp.ne.s32.totalorder %s70, %s71
      %p83 = scmp.eq.s32.totalorder %s19, 1
      %p84 = por %p82, %p83
      %p86 = scmp.ne.s32.totalorder %s71, %s85
      %p87 = scmp.eq.s32.totalorder %s19, 0
      %p88 = por %p86, %p87
      %s89 = ssub.s32 %s13, %s20
      %p90 = scmp.eq.s32.totalorder %s89, 0
      %s92 = sadd.s32 %s91, 1
      %s93 = scalar_select %p90, %s91, %s92
      %p96 = pneg %p90
      %p97 = scmp.eq.s32.totalorder %s13, 1
      %p98 = por %p96, %p97
      %p99 = scmp.ne.s32.totalorder %s91, %s94
      %p100 = scmp.eq.s32.totalorder %s13, 0
      %p101 = por %p99, %p100
      %p102 = scmp.ne.s32.totalorder %s91, %s94
      %p103 = scmp.eq.s32.totalorder %s18, 1
      %p104 = por %p102, %p103
      %p105 = scmp.ne.s32.totalorder %s94, %s95
      %p106 = scmp.eq.s32.totalorder %s18, 0
      %p107 = por %p105, %p106
      %p108 = scmp.ne.s32.totalorder %s94, %s95
      %p109 = scmp.eq.s32.totalorder %s19, 1
      %p110 = por %p108, %p109
      %p112 = scmp.ne.s32.totalorder %s95, %s111
      %p113 = scmp.eq.s32.totalorder %s19, 0
      %p114 = por %p112, %p113
      %p115 = scmp.le.s32.totalorder 1, %s13
      %p116 = scmp.lt.s32.totalorder %s13, 3
      %p117 = pnand %p115, %p116
      %p118 = pneg %p117
      // Predicated region
      $region9: #{tpu_custom_call.1} parent=5 // pred_check
        _
      $region10: #{tpu_custom_call.1} parent=5 // pred_check_branch
        %120 = sbr.rel (%p117) target = $region12
      $region11: #{tpu_custom_call.1} parent=5 // pred_region
        %s121 = ssub.s32 %s13, 1
        // Predicated region
        $region13: #{tpu_custom_call.1} parent=11 // pred_check
          %p122 = pneg %p60
        $region14: #{tpu_custom_call.1} parent=11 // pred_check_branch
          %124 = sbr.rel (%p122) target = $region16
        $region15: #{tpu_custom_call.1} parent=11 // pred_region
          %s126 = ssub.s32 128, 128
          %127 = vsyncadd [#allocation4], %s126
          %s129 = sshll.u32 [#allocation3], 4
          %s130 = int_to_ptr.vmem [resolvable:$true] %s129
          %132 = dma.hbm_to_vmem [thread:$0]  %s1, 128, %s130, [#allocation4]
        $region16: #{tpu_custom_call.1} parent=11 // pred_fallthru
          _
        // Predicated region
        $region17: #{tpu_custom_call.1} parent=11 // pred_check
          %p133 = pneg %p81
        $region18: #{tpu_custom_call.1} parent=11 // pred_check_branch
          %135 = sbr.rel (%p133) target = $region20
        $region19: #{tpu_custom_call.1} parent=11 // pred_region
          _
        $region20: #{tpu_custom_call.1} parent=11 // pred_fallthru
          _
      $region12: #{tpu_custom_call.1} parent=5 // pred_fallthru
        _
      %p136 = scmp.lt.s32.totalorder %s13, 2
      // Predicated region
      $region21: #{tpu_custom_call.1} parent=5 // pred_check
        %p137 = pneg %p136
      $region22: #{tpu_custom_call.1} parent=5 // pred_check_branch
        %139 = sbr.rel (%p137) target = $region24
      $region23: #{tpu_custom_call.1} parent=5 // pred_region
        // Predicated region
        $region25: #{tpu_custom_call.1} parent=23 // pred_check
          %p140 = pneg %p33
        $region26: #{tpu_custom_call.1} parent=23 // pred_check_branch
          %142 = sbr.rel (%p140) target = $region28
        $region27: #{tpu_custom_call.1} parent=23 // pred_region
          %p143 = scmp.lt.s32.totalorder %s13, 1
          %s144 = scalar_select %p143, %s13, 1
          %s145 = smul.addr %s144, 4
          %s146 = scalar_lea.vmem %s0, %s145
        $region28: #{tpu_custom_call.1} parent=23 // pred_fallthru
          _
      $region24: #{tpu_custom_call.1} parent=5 // pred_fallthru
        _
      %p147 = scmp.le.s32.totalorder 1, %s13
      %p148 = scmp.lt.s32.totalorder %s13, 3
      %p149 = pnand %p147, %p148
      %p150 = pneg %p149
      // Predicated region
      $region29: #{tpu_custom_call.1} parent=5 // pred_check
        _
      $region30: #{tpu_custom_call.1} parent=5 // pred_check_branch
        %152 = sbr.rel (%p149) target = $region32
      $region31: #{tpu_custom_call.1} parent=5 // pred_region
        %s153 = ssub.s32 %s13, 1
        // Predicated region
        $region33: #{tpu_custom_call.1} parent=31 // pred_check
          %p154 = pneg %p60
        $region34: #{tpu_custom_call.1} parent=31 // pred_check_branch
          %156 = sbr.rel (%p154) target = $region36
        $region35: #{tpu_custom_call.1} parent=31 // pred_region
          %157 = dma.done [#allocation4], 128
        $region36: #{tpu_custom_call.1} parent=31 // pred_fallthru
          _
        %p158 = scmp.lt.s32.totalorder %s18, 1
        %s159 = scalar_select %p158, %s18, 1
        %s160 = smul.addr %s159, 4
        %s161 = scalar_lea.vmem %s0, %s160
        %p162 = pneg %p39
        %p163 = pneg %p36
        %p164 = pneg %p60
        %p165 = pneg %p57
        %p166 = pneg %p81
        %p167 = pneg %p78
        %p168 = pneg %p107
        %p169 = pneg %p104
        %s170 = sand.u32 %s94, 1
        %s171 = scalar_lea.sflag [#allocation5], %s170
        %s172 = sand.u32 %s94, 1
        %s173 = smul.addr %s172, 8
        %s174 = scalar_lea.vmem [#allocation6], %s173
        %p175 = scmp.lt.s32.totalorder %s18, 1
        %s176 = scalar_select %p175, %s18, 1
        %s177 = smul.addr %s176, 4
        %s178 = scalar_lea.vmem %s0, %s177
        %vm179 = vcmask 130048
        %180 = vst.msk [vmem:[#allocation2] sm:$0xff] %vm179, 0.0
        %vm181 = vcmask 125952
        %182 = vst.msk [vmem:[#allocation2 + $0x8] sm:$0xf] %vm181, 0.0
        %v183 = vld [vmem:[%s178] sm:$0xf]
        %185 = vrot.lane.b32.xlu0 %v183, 1
        %v186 = vpop.permute.xlu0 %185
        %vm188 = vcmask 125960
        %189 = vst.msk [vmem:[#allocation2] sm:$0xf] %vm188, %v186
        %190 = vst.msk [vmem:[#allocation2 + $0x4] sm:$0xf] %vm181, %v183
        %191 = vrot.lane.b32.xlu0 %v183, 127
        %v192 = vpop.permute.xlu0 %191
        %vm194 = vcmask 117760
        %195 = vst.msk [vmem:[#allocation2 + $0x8] sm:$0xf] %vm194, %v192
        %v196 = vld [vmem:[#allocation3] sm:$0xff]
        %v197 = vld [vmem:[#allocation2] sm:$0xff]
        %v198 = vld [vmem:[#allocation2 + $0x8] sm:$0xf]
        %v199 = vld [vmem:[%s2] sm:$0xff]
        %201 = vset.pattern.permute.xlu0 0
        %202 = vperm.xlu0 %201, %v199
        %v203 = vpop.permute.xlu0 %202
        %vm205 = vcmask 97280
        %v207 = vsel %vm205, %v196, 0
        %vm209 = vcmask 1043456
        %v211 = vsel %vm209, %v198, 0
        %213 = vmatprep.subr.mxu0 0.0
        %214 = vmatpush1.msra.mxu0 0.0
        %215 = vmatprep.subr.mxu0 0.0
        %216 = vmatpush1.msra.mxu0 0.0
        %217 = vmatprep.subr.mxu0 0.0
        %218 = vmatpush1.msra.mxu0 0.0
        %219 = vmatprep.subr.mxu0 0.0
        %220 = vmatpush1.msra.mxu0 0.0
        %221 = vmatprep.subr.mxu0 0.0
        %222 = vmatpush1.msra.mxu0 0.0
        %223 = vmatprep.subr.mxu0 0.0
        %224 = vmatpush1.msra.mxu0 0.0
        %225 = vmatprep.subr.mxu0 0.0
        %226 = vmatpush1.msra.mxu0 0.0
        %227 = vmatprep.subr.mxu0 0.0
        %228 = vmatpush1.msra.mxu0 0.0
        %229 = vmatprep.subr.mxu0 0.0
        %230 = vmatpush1.msra.mxu0 0.0
        %231 = vmatprep.subr.mxu0 0.0
        %232 = vmatpush1.msra.mxu0 0.0
        %233 = vmatprep.subr.mxu0 0.0
        %234 = vmatpush1.msra.mxu0 0.0
        %235 = vmatprep.subr.mxu0 0.0
        %236 = vmatpush1.msra.mxu0 0.0
        %237 = vmatprep.subr.mxu0 0.0
        %238 = vmatpush1.msra.mxu0 0.0
        %239 = vmatprep.subr.mxu0 0.0
        %240 = vmatpush1.msra.mxu0 0.0
        %241 = vmatprep.subr.mxu0 0.0
        %242 = vmatpush1.msra.mxu0 %v211
        %243 = vmatprep.subr.mxu0 0.0
        %244 = vmatpush1.msra.mxu0 %v197
        %245 = vmatprep.subr.mxu0 0.0
        %246 = vmatpush2.msra.mxu0 0.0
        %247 = vmatprep.subr.mxu0 0.0
        %248 = vmatpush2.msra.mxu0 0.0
        %249 = vmatprep.subr.mxu0 0.0
        %250 = vmatpush2.msra.mxu0 0.0
        %251 = vmatprep.subr.mxu0 0.0
        %252 = vmatpush2.msra.mxu0 0.0
        %253 = vmatprep.subr.mxu0 0.0
        %254 = vmatpush2.msra.mxu0 0.0
        %255 = vmatprep.subr.mxu0 0.0
        %256 = vmatpush2.msra.mxu0 0.0
        %257 = vmatprep.subr.mxu0 0.0
        %258 = vmatpush2.msra.mxu0 0.0
        %259 = vmatprep.subr.mxu0 0.0
        %260 = vmatpush2.msra.mxu0 0.0
        %261 = vmatprep.subr.mxu0 0.0
        %262 = vmatpush2.msra.mxu0 0.0
        %263 = vmatprep.subr.mxu0 0.0
        %264 = vmatpush2.msra.mxu0 0.0
        %265 = vmatprep.subr.mxu0 0.0
        %266 = vmatpush2.msra.mxu0 0.0
        %267 = vmatprep.subr.mxu0 0.0
        %268 = vmatpush2.msra.mxu0 0.0
        %269 = vmatprep.subr.mxu0 0.0
        %270 = vmatpush2.msra.mxu0 0.0
        %271 = vmatprep.subr.mxu0 0.0
        %272 = vmatpush2.msra.mxu0 0.0
        %273 = vmatprep.subr.mxu0 0.0
        %274 = vmatpush2.msra.mxu0 0.0
        %275 = vmatprep.subr.mxu0 0.0
        %276 = vmatpush2.msra.mxu0 0.0
        %277 = vmatprep.mubr.f32.mxu0 0.0
        %278 = vmatmul.mubr.f32.gmra.mxu0 %v207
        %v279 = vpop.f32.mrf.mxu0
        %v280 = vadd.f32 %v203, %v279
        %v281 = vpop.f32.mrf.mxu0
        %282 = vdwg.mxu0
        %v283 = vmax.f32 %v280, 0.0
        %284 = vst.msk [vmem:[%s174] sm:$0xff] %vm179, %v283
        %s285 = sand.u32 %s94, 1
        %s286 = scalar_lea.sflag [#allocation5], %s285
        %s287 = sand.u32 %s94, 1
        %s288 = smul.addr %s287, 8
        %s289 = scalar_lea.vmem [#allocation6], %s288
        // Predicated region
        $region37: #{tpu_custom_call.1} parent=31 // pred_check
          %p290 = pneg %p104
        $region38: #{tpu_custom_call.1} parent=31 // pred_check_branch
          %292 = sbr.rel (%p290) target = $region40
        $region39: #{tpu_custom_call.1} parent=31 // pred_region
          %s294 = ssub.s32 128, 128
          %295 = vsyncadd %s286, %s294
          %s296 = smul.addr %s18, 128
          %s297 = scalar_lea.hbm %s3, %s296
          %s299 = sshll.u32 %s289, 4
          %s300 = int_to_ptr.vmem [resolvable:$true] %s299
          %302 = dma.vmem_to_hbm [thread:$0]  %s300, 128, %s297, %s286
        $region40: #{tpu_custom_call.1} parent=31 // pred_fallthru
          _
      $region32: #{tpu_custom_call.1} parent=5 // pred_fallthru
        _
      %p303 = scmp.le.s32.totalorder 2, %s13
      // Predicated region
      $region41: #{tpu_custom_call.1} parent=5 // pred_check
        %p304 = pneg %p303
      $region42: #{tpu_custom_call.1} parent=5 // pred_check_branch
        %306 = sbr.rel (%p304) target = $region44
      $region43: #{tpu_custom_call.1} parent=5 // pred_region
        %s307 = ssub.s32 %s13, 2
        // Predicated region
        $region45: #{tpu_custom_call.1} parent=43 // pred_check
          %p308 = pneg %p110
        $region46: #{tpu_custom_call.1} parent=43 // pred_check_branch
          %310 = sbr.rel (%p308) target = $region48
        $region47: #{tpu_custom_call.1} parent=43 // pred_region
          %s311 = sand.u32 %s95, 1
          %s312 = scalar_lea.sflag [#allocation5], %s311
          %s313 = sand.u32 %s95, 1
          %s314 = smul.addr %s313, 8
          %s315 = scalar_lea.vmem [#allocation6], %s314
          %316 = dma.done %s312, 128
        $region48: #{tpu_custom_call.1} parent=43 // pred_fallthru
          _
      $region44: #{tpu_custom_call.1} parent=5 // pred_fallthru
        _
    $region6: #{tpu_custom_call.1} parent=1 // loop_footer
      %s17 = sadd.s32 1, %s13
    $region7: #{tpu_custom_call.1} parent=1 // loop_footer_branch
      %12 = sbr.rel target = $region3
    $region8: #{tpu_custom_call.1} parent=1 // loop_exit
      _
    %317 = vsyncpa [#allocation4], 1
    %s318 = scalar_lea.sflag [#allocation4], 1
    %319 = vsyncpa %s318, 1
    %320 = vsyncpa [#allocation5], 1
    %s321 = scalar_lea.sflag [#allocation5], 1
    %322 = vsyncpa %s321, 1

</llo_original>
